<compile_context>
chip_gen: v5e
topology: v5e:2x2
jax: 0.10.0
libtpu: 0.0.40
codegen_flags: <defaults>
</compile_context>

<pallas_src>
import functools

import jax
import jax.numpy as jnp
from jax import lax
from jax.experimental import pallas as pl
from jax.experimental.pallas import tpu as pltpu

_SUBLANE = 8
_LANE = 128


def _round_up(x, m):
    return ((x + m - 1) // m) * m


def _pick_batch_block(bp):
    """Largest multiple-of-8 divisor of bp that is <= 256."""
    for cand in (256, 128, 64, 32, 16, 8):
        if bp >= cand and bp % cand == 0:
            return cand
    return bp


def _pick_time_block(s):
    """(t_blk, padded_S). Prefer an exact divisor; otherwise front-pad to 16s."""
    for cand in (32, 16, 8):
        if s % cand == 0:
            return cand, s
    t_blk = 16
    return t_blk, _round_up(s, t_blk)


def _rnn_seq_kernel(xw_ref, whh_ref, out_ref, h_ref, *, t_blk):
    """Recurrence over one (t_blk, B_BLK) tile; emits every hidden state.

    xw_ref : (t_blk, B_BLK, Hp)  precomputed x@W_ih^T + bias for this tile
    whh_ref: (Hp, Hp)            W_hh^T, resident across the whole grid
    out_ref: (t_blk, B_BLK, Hp)  hidden states for this tile
    h_ref  : (B_BLK, Hp)         VMEM scratch carrying h across time blocks
    """
    t = pl.program_id(1)

    @pl.when(t == 0)
    def _():
        h_ref[...] = jnp.zeros_like(h_ref)

    whh = whh_ref[...]  # hoisted load, reused by every unrolled step

    def step(i, h):
        h_new = jnp.tanh(
            xw_ref[i] + jnp.dot(h, whh, preferred_element_type=jnp.float32)
        )
        out_ref[i] = h_new.astype(out_ref.dtype)
        return h_new

    h_ref[...] = lax.fori_loop(0, t_blk, step, h_ref[...], unroll=True)


def _rnn_last_kernel(xw_ref, whh_ref, out_ref, h_ref, *, t_blk):
    """Same recurrence, but only the final hidden state is written to HBM.

    out_ref: (B_BLK, Hp) — constant block index along the time axis; written
    once under pl.when at the last time block (accumulator-style output).
    """
    t = pl.program_id(1)

    @pl.when(t == 0)
    def _():
        h_ref[...] = jnp.zeros_like(h_ref)

    whh = whh_ref[...]

    def step(i, h):
        return jnp.tanh(
            xw_ref[i] + jnp.dot(h, whh, preferred_element_type=jnp.float32)
        )

    h_ref[...] = lax.fori_loop(0, t_blk, step, h_ref[...], unroll=True)

    @pl.when(t == pl.num_programs(1) - 1)
    def _():
        out_ref[...] = h_ref[...].astype(out_ref.dtype)


def _rnn_recurrence(xw_pad, whh_t_pad, *, t_blk, b_blk, last_only):
    """Run the recurrent part of one layer over the padded pre-activations.

    xw_pad    : (Sp, Bp, Hp) f32, Sp % t_blk == 0, Bp % b_blk == 0, Hp % 128 == 0
    whh_t_pad : (Hp, Hp) f32
    """
    sp, bp, hp = xw_pad.shape
    grid = (bp // b_blk, sp // t_blk)

    in_specs = [
        pl.BlockSpec((t_blk, b_blk, hp), lambda b, t: (t, b, 0)),
        pl.BlockSpec((hp, hp), lambda b, t: (0, 0)),
    ]

    if last_only:
        kernel = functools.partial(_rnn_last_kernel, t_blk=t_blk)
        out_specs = pl.BlockSpec((b_blk, hp), lambda b, t: (b, 0))
        out_shape = jax.ShapeDtypeStruct((bp, hp), jnp.float32)
    else:
        kernel = functools.partial(_rnn_seq_kernel, t_blk=t_blk)
        out_specs = pl.BlockSpec((t_blk, b_blk, hp), lambda b, t: (t, b, 0))
        out_shape = jax.ShapeDtypeStruct((sp, bp, hp), jnp.float32)

    grid_spec = pltpu.PrefetchScalarGridSpec(
        num_scalar_prefetch=0,
        grid=grid,
        in_specs=in_specs,
        out_specs=out_specs,
        scratch_shapes=[pltpu.VMEM((b_blk, hp), jnp.float32)],
    )

    return pl.pallas_call(
        kernel,
        out_shape=out_shape,
        grid_spec=grid_spec,
        compiler_params=pltpu.CompilerParams(
            # batch blocks are independent (megacore-shardable); time is the
            # sequential carry axis.
            dimension_semantics=("parallel", "arbitrary"),
        ),
    )(xw_pad, whh_t_pad)


def init_rnn_params(key, input_size, hidden_size, num_layers):
    """Deterministic PyTorch-style uniform(-1/sqrt(H), 1/sqrt(H)) init."""
    bound = 1.0 / jnp.sqrt(jnp.asarray(hidden_size, jnp.float32))
    params = []
    for layer in range(num_layers):
        in_sz = input_size if layer == 0 else hidden_size
        key, k1, k2, k3, k4 = jax.random.split(key, 5)
        w_ih = jax.random.uniform(k1, (hidden_size, in_sz), jnp.float32, -bound, bound)
        w_hh = jax.random.uniform(k2, (hidden_size, hidden_size), jnp.float32, -bound, bound)
        b_ih = jax.random.uniform(k3, (hidden_size,), jnp.float32, -bound, bound)
        b_hh = jax.random.uniform(k4, (hidden_size,), jnp.float32, -bound, bound)
        params.append((w_ih, w_hh, b_ih, b_hh))
    return params


@jax.jit
def rnn_forward(x_bsi, *flat_params):
    """Equivalent of RNN.forward: returns out[:, -1, :] of shape (B, H)."""
    assert len(flat_params) % 4 == 0 and len(flat_params) > 0
    num_layers = len(flat_params) // 4

    B, S, _ = x_bsi.shape
    bp = _round_up(B, _SUBLANE)
    b_blk = _pick_batch_block(bp)
    t_blk, sp = _pick_time_block(S)
    pad_s = sp - S

    layer_in = x_bsi.astype(jnp.float32)  # layer 0 input is (B, S, I)
    batch_first = True

    for layer in range(num_layers):
        w_ih, w_hh, b_ih, b_hh = flat_params[4 * layer: 4 * layer + 4]
        H = w_hh.shape[0]
        hp = _round_up(H, _LANE)

        wih_t = w_ih.T.astype(jnp.float32)                 # (I_l, H)
        bias = (b_ih + b_hh).astype(jnp.float32)           # (H,)

        # Non-recurrent projection as one big MXU matmul, output directly in
        # (S, B, H) order (no standalone transpose pass over x).
        if batch_first:
            xw = jnp.einsum('bsi,ih->sbh', layer_in, wih_t,
                            precision=lax.Precision.HIGHEST)
        else:
            xw = jnp.einsum('sbi,ih->sbh', layer_in, wih_t,
                            precision=lax.Precision.HIGHEST)
        xw = xw + bias[None, None, :]

        # Pad: front-pad time with zero pre-activations (keeps h == 0, so it's
        # a semantic no-op), pad batch to sublane and hidden to lane multiples.
        xw_pad = jnp.pad(xw, ((pad_s, 0), (0, bp - B), (0, hp - H)))
        whh_t_pad = jnp.pad(w_hh.T.astype(jnp.float32),
                            ((0, hp - H), (0, hp - H)))

        last_only = layer == num_layers - 1
        out = _rnn_recurrence(xw_pad, whh_t_pad,
                              t_blk=t_blk, b_blk=b_blk, last_only=last_only)

        if last_only:
            return out[:B, :H]                             # (B, H)

        layer_in = out[pad_s:, :B, :H]                     # (S, B, H)
        batch_first = False


def rnn_reference(x_bsi, params):
    """Pure-JAX reference (PyTorch nn.RNN semantics, h0 = 0)."""
    B, S, _ = x_bsi.shape
    h_in = x_bsi.astype(jnp.float32)
    for (w_ih, w_hh, b_ih, b_hh) in params:
        H = w_hh.shape[0]
        h = jnp.zeros((B, H), jnp.float32)
        outs = []
        for t in range(S):
            h = jnp.tanh(
                jnp.dot(h_in[:, t, :], w_ih.T, precision=lax.Precision.HIGHEST)
                + b_ih
                + jnp.dot(h, w_hh.T, precision=lax.Precision.HIGHEST)
                + b_hh
            )
            outs.append(h)
        h_in = jnp.stack(outs, axis=1)  # (B, S, H)
    return h_in[:, -1, :]


if __name__ == "__main__":
    batch, seq, input_size, hidden_size = 2, 8, 16, 32

    key = jax.random.PRNGKey(0)
    key, kx = jax.random.split(key)
    x = jax.random.normal(kx, (batch, seq, input_size), jnp.float32)

    # Exercise both kernel variants: num_layers=1 (last-h-only path) and
    # num_layers=2 (full-sequence path for the lower layer).
    for num_layers in (1, 2):
        params = init_rnn_params(jax.random.PRNGKey(1 + num_layers),
                                 input_size, hidden_size, num_layers)
        flat_params = [p for layer in params for p in layer]

        out = rnn_forward(x, *flat_params)
        out = jax.block_until_ready(out)

        ref = rnn_reference(x, params)
        assert out.shape == (batch, hidden_size), out.shape
        max_err = float(jnp.max(jnp.abs(out - ref)))
        assert jnp.allclose(out, ref, atol=2e-5, rtol=2e-5), max_err

    print("KERNEL_OK")
</pallas_src>

<mosaic_0001>
module attributes {stable_mosaic.version = 11 : i64} {
  func.func @_rnn_last_kernel(%arg0: i32, %arg1: i32, %arg2: memref<8x8x128xf32, #tpu.memory_space<vmem>>, %arg3: memref<128x128xf32, #tpu.memory_space<vmem>>, %arg4: memref<8x128xf32, #tpu.memory_space<vmem>>, %arg5: memref<8x128xf32, #tpu.memory_space<vmem>>) attributes {dimension_semantics = [#tpu.dimension_semantics<parallel>, #tpu.dimension_semantics<arbitrary>], iteration_bounds = array<i64: 1, 1>, scalar_prefetch = 0 : i64, scratch_operands = 1 : i64, tpu.core_type = #tpu.core_type<tc>, window_params = [{transform_indices = @transform_0, window_bounds = array<i64: 8, 8, 128>}, {pipeline_mode = #tpu.pipeline_mode<synchronous>, transform_indices = @transform_1, window_bounds = array<i64: 128, 128>}, {transform_indices = @transform_2, window_bounds = array<i64: 8, 128>}]} {
    %c0_i32 = arith.constant 0 : i32
    %0 = arith.cmpi eq, %arg1, %c0_i32 : i32
    %1 = arith.extui %0 : i1 to i32
    %c0_i32_0 = arith.constant 0 : i32
    %2 = arith.cmpi ne, %1, %c0_i32_0 : i32
    scf.if %2 {
      %cst_32 = arith.constant 0.000000e+00 : f32
      %57 = vector.broadcast %cst_32 : f32 to vector<8x128xf32>
      %c0_33 = arith.constant 0 : index
      %c0_34 = arith.constant 0 : index
      %58 = vector.load %arg5[%c0_33, %c0_34] : memref<8x128xf32, #tpu.memory_space<vmem>>, vector<8x128xf32>
      tpu.vector_store %arg5[%c0_33, %c0_34], %57 {strides = array<i32>} : memref<8x128xf32, #tpu.memory_space<vmem>>, vector<8x128xf32>,
    } else {
    }
    %c0 = arith.constant 0 : index
    %c0_1 = arith.constant 0 : index
    %3 = vector.load %arg3[%c0, %c0_1] : memref<128x128xf32, #tpu.memory_space<vmem>>, vector<128x128xf32>
    %c0_2 = arith.constant 0 : index
    %c0_3 = arith.constant 0 : index
    %4 = vector.load %arg5[%c0_2, %c0_3] : memref<8x128xf32, #tpu.memory_space<vmem>>, vector<8x128xf32>
    %c0_i32_4 = arith.constant 0 : i32
    %5 = arith.index_cast %c0_i32_4 : i32 to index
    %c0_5 = arith.constant 0 : index
    %c0_6 = arith.constant 0 : index
    %6 = vector.load %arg2[%5, %c0_5, %c0_6] : memref<8x8x128xf32, #tpu.memory_space<vmem>>, vector<1x8x128xf32>
    %7 = vector.shape_cast %6 : vector<1x8x128xf32> to vector<8x128xf32>
    %cst = arith.constant dense<0.000000e+00> : vector<8x128xf32>
    %8 = tpu.matmul %4, %3, %cst {dimension_numbers = #tpu.dot_dimension_numbers<[1], [0], [0], [1], [0, 0, 1, 1], [], []>} : vector<8x128xf32>, vector<128x128xf32>, vector<8x128xf32> -> vector<8x128xf32>
    %9 = arith.addf %7, %8 : vector<8x128xf32>
    %10 = math.tanh %9 : vector<8x128xf32>
    %c1_i32 = arith.constant 1 : i32
    %11 = arith.index_cast %c1_i32 : i32 to index
    %c0_7 = arith.constant 0 : index
    %c0_8 = arith.constant 0 : index
    %12 = vector.load %arg2[%11, %c0_7, %c0_8] : memref<8x8x128xf32, #tpu.memory_space<vmem>>, vector<1x8x128xf32>
    %13 = vector.shape_cast %12 : vector<1x8x128xf32> to vector<8x128xf32>
    %cst_9 = arith.constant dense<0.000000e+00> : vector<8x128xf32>
    %14 = tpu.matmul %10, %3, %cst_9 {dimension_numbers = #tpu.dot_dimension_numbers<[1], [0], [0], [1], [0, 0, 1, 1], [], []>} : vector<8x128xf32>, vector<128x128xf32>, vector<8x128xf32> -> vector<8x128xf32>
    %15 = arith.addf %13, %14 : vector<8x128xf32>
    %16 = math.tanh %15 : vector<8x128xf32>
    %c2_i32 = arith.constant 2 : i32
    %17 = arith.index_cast %c2_i32 : i32 to index
    %c0_10 = arith.constant 0 : index
    %c0_11 = arith.constant 0 : index
    %18 = vector.load %arg2[%17, %c0_10, %c0_11] : memref<8x8x128xf32, #tpu.memory_space<vmem>>, vector<1x8x128xf32>
    %19 = vector.shape_cast %18 : vector<1x8x128xf32> to vector<8x128xf32>
    %cst_12 = arith.constant dense<0.000000e+00> : vector<8x128xf32>
    %20 = tpu.matmul %16, %3, %cst_12 {dimension_numbers = #tpu.dot_dimension_numbers<[1], [0], [0], [1], [0, 0, 1, 1], [], []>} : vector<8x128xf32>, vector<128x128xf32>, vector<8x128xf32> -> vector<8x128xf32>
    %21 = arith.addf %19, %20 : vector<8x128xf32>
    %22 = math.tanh %21 : vector<8x128xf32>
    %c3_i32 = arith.constant 3 : i32
    %23 = arith.index_cast %c3_i32 : i32 to index
    %c0_13 = arith.constant 0 : index
    %c0_14 = arith.constant 0 : index
    %24 = vector.load %arg2[%23, %c0_13, %c0_14] : memref<8x8x128xf32, #tpu.memory_space<vmem>>, vector<1x8x128xf32>
    %25 = vector.shape_cast %24 : vector<1x8x128xf32> to vector<8x128xf32>
    %cst_15 = arith.constant dense<0.000000e+00> : vector<8x128xf32>
    %26 = tpu.matmul %22, %3, %cst_15 {dimension_numbers = #tpu.dot_dimension_numbers<[1], [0], [0], [1], [0, 0, 1, 1], [], []>} : vector<8x128xf32>, vector<128x128xf32>, vector<8x128xf32> -> vector<8x128xf32>
    %27 = arith.addf %25, %26 : vector<8x128xf32>
    %28 = math.tanh %27 : vector<8x128xf32>
    %c4_i32 = arith.constant 4 : i32
    %29 = arith.index_cast %c4_i32 : i32 to index
    %c0_16 = arith.constant 0 : index
    %c0_17 = arith.constant 0 : index
    %30 = vector.load %arg2[%29, %c0_16, %c0_17] : memref<8x8x128xf32, #tpu.memory_space<vmem>>, vector<1x8x128xf32>
    %31 = vector.shape_cast %30 : vector<1x8x128xf32> to vector<8x128xf32>
    %cst_18 = arith.constant dense<0.000000e+00> : vector<8x128xf32>
    %32 = tpu.matmul %28, %3, %cst_18 {dimension_numbers = #tpu.dot_dimension_numbers<[1], [0], [0], [1], [0, 0, 1, 1], [], []>} : vector<8x128xf32>, vector<128x128xf32>, vector<8x128xf32> -> vector<8x128xf32>
    %33 = arith.addf %31, %32 : vector<8x128xf32>
    %34 = math.tanh %33 : vector<8x128xf32>
    %c5_i32 = arith.constant 5 : i32
    %35 = arith.index_cast %c5_i32 : i32 to index
    %c0_19 = arith.constant 0 : index
    %c0_20 = arith.constant 0 : index
    %36 = vector.load %arg2[%35, %c0_19, %c0_20] : memref<8x8x128xf32, #tpu.memory_space<vmem>>, vector<1x8x128xf32>
    %37 = vector.shape_cast %36 : vector<1x8x128xf32> to vector<8x128xf32>
    %cst_21 = arith.constant dense<0.000000e+00> : vector<8x128xf32>
    %38 = tpu.matmul %34, %3, %cst_21 {dimension_numbers = #tpu.dot_dimension_numbers<[1], [0], [0], [1], [0, 0, 1, 1], [], []>} : vector<8x128xf32>, vector<128x128xf32>, vector<8x128xf32> -> vector<8x128xf32>
    %39 = arith.addf %37, %38 : vector<8x128xf32>
    %40 = math.tanh %39 : vector<8x128xf32>
    %c6_i32 = arith.constant 6 : i32
    %41 = arith.index_cast %c6_i32 : i32 to index
    %c0_22 = arith.constant 0 : index
    %c0_23 = arith.constant 0 : index
    %42 = vector.load %arg2[%41, %c0_22, %c0_23] : memref<8x8x128xf32, #tpu.memory_space<vmem>>, vector<1x8x128xf32>
    %43 = vector.shape_cast %42 : vector<1x8x128xf32> to vector<8x128xf32>
    %cst_24 = arith.constant dense<0.000000e+00> : vector<8x128xf32>
    %44 = tpu.matmul %40, %3, %cst_24 {dimension_numbers = #tpu.dot_dimension_numbers<[1], [0], [0], [1], [0, 0, 1, 1], [], []>} : vector<8x128xf32>, vector<128x128xf32>, vector<8x128xf32> -> vector<8x128xf32>
    %45 = arith.addf %43, %44 : vector<8x128xf32>
    %46 = math.tanh %45 : vector<8x128xf32>
    %c7_i32 = arith.constant 7 : i32
    %47 = arith.index_cast %c7_i32 : i32 to index
    %c0_25 = arith.constant 0 : index
    %c0_26 = arith.constant 0 : index
    %48 = vector.load %arg2[%47, %c0_25, %c0_26] : memref<8x8x128xf32, #tpu.memory_space<vmem>>, vector<1x8x128xf32>
    %49 = vector.shape_cast %48 : vector<1x8x128xf32> to vector<8x128xf32>
    %cst_27 = arith.constant dense<0.000000e+00> : vector<8x128xf32>
    %50 = tpu.matmul %46, %3, %cst_27 {dimension_numbers = #tpu.dot_dimension_numbers<[1], [0], [0], [1], [0, 0, 1, 1], [], []>} : vector<8x128xf32>, vector<128x128xf32>, vector<8x128xf32> -> vector<8x128xf32>
    %51 = arith.addf %49, %50 : vector<8x128xf32>
    %52 = math.tanh %51 : vector<8x128xf32>
    %c8_i32 = arith.constant 8 : i32
    %c0_28 = arith.constant 0 : index
    %c0_29 = arith.constant 0 : index
    %53 = vector.load %arg5[%c0_28, %c0_29] : memref<8x128xf32, #tpu.memory_space<vmem>>, vector<8x128xf32>
    tpu.vector_store %arg5[%c0_28, %c0_29], %52 {strides = array<i32>} : memref<8x128xf32, #tpu.memory_space<vmem>>, vector<8x128xf32>,
    %c0_i32_30 = arith.constant 0 : i32
    %54 = arith.cmpi eq, %arg1, %c0_i32_30 : i32
    %55 = arith.extui %54 : i1 to i32
    %c0_i32_31 = arith.constant 0 : i32
    %56 = arith.cmpi ne, %55, %c0_i32_31 : i32
    scf.if %56 {
      %c0_32 = arith.constant 0 : index
      %c0_33 = arith.constant 0 : index
      %57 = vector.load %arg5[%c0_32, %c0_33] : memref<8x128xf32, #tpu.memory_space<vmem>>, vector<8x128xf32>
      %c0_34 = arith.constant 0 : index
      %c0_35 = arith.constant 0 : index
      %58 = vector.load %arg4[%c0_34, %c0_35] : memref<8x128xf32, #tpu.memory_space<vmem>>, vector<8x128xf32>
      tpu.vector_store %arg4[%c0_34, %c0_35], %57 {strides = array<i32>} : memref<8x128xf32, #tpu.memory_space<vmem>>, vector<8x128xf32>,
    } else {
    }
    return
  }
  func.func @transform_0(%arg0: i32, %arg1: i32) -> (i32, i32, i32) {
    %c0_i32 = arith.constant 0 : i32
    %c0_i32_0 = arith.constant 0 : i32
    return %arg1, %arg0, %c0_i32 : i32, i32, i32
  }
  func.func @transform_1(%arg0: i32, %arg1: i32) -> (i32, i32) {
    %c0_i32 = arith.constant 0 : i32
    %c0_i32_0 = arith.constant 0 : i32
    %c0_i32_1 = arith.constant 0 : i32
    return %c0_i32, %c0_i32_0 : i32, i32
  }
  func.func @transform_2(%arg0: i32, %arg1: i32) -> (i32, i32) {
    %c0_i32 = arith.constant 0 : i32
    %c0_i32_0 = arith.constant 0 : i32
    return %arg0, %c0_i32 : i32, i32
  }
}

</mosaic_0001>

<llo_original>
// kernel: rnn_forward.1
$region0: #{rnn_forward.1}
  #allocation0 [shape = 'u32[]', space=smem, size = 0x4, offset = 0x4, fixed_abs, tag = 'smem constant byte address 0x4 - core index']
  #allocation1 [shape = 'u32[72,128]{1,0:T(1,128)}', space=vmem, size = 0x9000, scoped, tag = 'internal scratch']
  #allocation2 [shape = 'f32[8,128]{1,0:T(8,128)}', space=vmem, size = 0x1000, scoped, tag = 'scratch operand']
  %s0 = inlined_call_operand.vmem [shape: f32[8,8,128], index: 0, kind: input, shape index: {}]
  %s1 = inlined_call_operand.vmem [shape: f32[128,128], index: 1, kind: input, shape index: {}]
  %s2 = inlined_call_operand.vmem [shape: f32[8,128], index: 2, kind: output, shape index: {}]
  %s3 = sld [smem:[#allocation0]]
  $region26: #{rnn_forward.1} parent=0
    _
  %s5 = ssub.s32 1, %s3
  %s6 = scalar_select 0, %s5, %s3
  // Predicated region
  $region2: #{rnn_forward.1} parent=0 // pred_check
    _
  $region3: #{rnn_forward.1} parent=0 // pred_check_branch
    %8 = sbr.rel (0) target = $region5
  $region4: #{rnn_forward.1} parent=0 // pred_region
    _
  $region5: #{rnn_forward.1} parent=0 // pred_fallthru
    _
  // Predicated region
  $region6: #{rnn_forward.1} parent=0 // pred_check
    _
  $region7: #{rnn_forward.1} parent=0 // pred_check_branch
    %10 = sbr.rel (0) target = $region9
  $region8: #{rnn_forward.1} parent=0 // pred_region
    _
  $region9: #{rnn_forward.1} parent=0 // pred_fallthru
    _
  %p11 = scmp.eq.s32.totalorder 0, 0
  // Predicated region
  $region10: #{rnn_forward.1} parent=0 // pred_check
    %p12 = pneg %p11
  $region11: #{rnn_forward.1} parent=0 // pred_check_branch
    %14 = sbr.rel (%p12) target = $region13
  $region12: #{rnn_forward.1} parent=0 // pred_region
    %15 = vst [vmem:[#allocation2] sm:$0xff] 0.0
  $region13: #{rnn_forward.1} parent=0 // pred_fallthru
    _
  %v16 = vld [vmem:[%s1] sm:$0xff]
  %v17 = vld [vmem:[%s1 + $0x8] sm:$0xff]
  %v18 = vld [vmem:[%s1 + $0x10] sm:$0xff]
  %v19 = vld [vmem:[%s1 + $0x18] sm:$0xff]
  %v20 = vld [vmem:[%s1 + $0x20] sm:$0xff]
  %v21 = vld [vmem:[%s1 + $0x28] sm:$0xff]
  %v22 = vld [vmem:[%s1 + $0x30] sm:$0xff]
  %v23 = vld [vmem:[%s1 + $0x38] sm:$0xff]
  %v24 = vld [vmem:[%s1 + $0x40] sm:$0xff]
  %v25 = vld [vmem:[%s1 + $0x48] sm:$0xff]
  %v26 = vld [vmem:[%s1 + $0x50] sm:$0xff]
  %v27 = vld [vmem:[%s1 + $0x58] sm:$0xff]
  %v28 = vld [vmem:[%s1 + $0x60] sm:$0xff]
  %v29 = vld [vmem:[%s1 + $0x68] sm:$0xff]
  %v30 = vld [vmem:[%s1 + $0x70] sm:$0xff]
  %v31 = vld [vmem:[%s1 + $0x78] sm:$0xff]
  %v32 = vld [vmem:[#allocation2] sm:$0xff]
  %v33 = vld [vmem:[%s0] sm:$0xff]
  %34 = vmatpush.msra.mxu0 %v31
  %35 = vmatpush.msra.mxu0 %v30
  %36 = vmatpush.msra.mxu0 %v29
  %37 = vmatpush.msra.mxu0 %v28
  %38 = vmatpush.msra.mxu0 %v27
  %39 = vmatpush.msra.mxu0 %v26
  %40 = vmatpush.msra.mxu0 %v25
  %41 = vmatpush.msra.mxu0 %v24
  %42 = vmatpush.msra.mxu0 %v23
  %43 = vmatpush.msra.mxu0 %v22
  %44 = vmatpush.msra.mxu0 %v21
  %45 = vmatpush.msra.mxu0 %v20
  %46 = vmatpush.msra.mxu0 %v19
  %47 = vmatpush.msra.mxu0 %v18
  %48 = vmatpush.msra.mxu0 %v17
  %49 = vmatpush.msra.mxu0 %v16
  %50 = vmatmul.f32.gmra.mxu0 %v32
  %v51 = vpop.f32.mrf.mxu0
  %v52 = vadd.f32 0.0, %v51
  %53 = vdwg.mxu0
  %v54 = vadd.f32 %v33, %v52
  %v55 = vtanh.pop %v54
  %s56 = scalar_lea.vmem %s0, 8
  %v57 = vld [vmem:[%s56] sm:$0xff]
  %58 = vmatpush.msra.mxu0 %v31
  %59 = vmatpush.msra.mxu0 %v30
  %60 = vmatpush.msra.mxu0 %v29
  %61 = vmatpush.msra.mxu0 %v28
  %62 = vmatpush.msra.mxu0 %v27
  %63 = vmatpush.msra.mxu0 %v26
  %64 = vmatpush.msra.mxu0 %v25
  %65 = vmatpush.msra.mxu0 %v24
  %66 = vmatpush.msra.mxu0 %v23
  %67 = vmatpush.msra.mxu0 %v22
  %68 = vmatpush.msra.mxu0 %v21
  %69 = vmatpush.msra.mxu0 %v20
  %70 = vmatpush.msra.mxu0 %v19
  %71 = vmatpush.msra.mxu0 %v18
  %72 = vmatpush.msra.mxu0 %v17
  %73 = vmatpush.msra.mxu0 %v16
  %74 = vmatmul.f32.gmra.mxu0 %v55
  %v75 = vpop.f32.mrf.mxu0
  %v76 = vadd.f32 0.0, %v75
  %77 = vdwg.mxu0
  %v78 = vadd.f32 %v57, %v76
  %v79 = vtanh.pop %v78
  %s80 = scalar_lea.vmem %s0, 16
  %v81 = vld [vmem:[%s80] sm:$0xff]
  %82 = vmatpush.msra.mxu0 %v31
  %83 = vmatpush.msra.mxu0 %v30
  %84 = vmatpush.msra.mxu0 %v29
  %85 = vmatpush.msra.mxu0 %v28
  %86 = vmatpush.msra.mxu0 %v27
  %87 = vmatpush.msra.mxu0 %v26
  %88 = vmatpush.msra.mxu0 %v25
  %89 = vmatpush.msra.mxu0 %v24
  %90 = vmatpush.msra.mxu0 %v23
  %91 = vmatpush.msra.mxu0 %v22
  %92 = vmatpush.msra.mxu0 %v21
  %93 = vmatpush.msra.mxu0 %v20
  %94 = vmatpush.msra.mxu0 %v19
  %95 = vmatpush.msra.mxu0 %v18
  %96 = vmatpush.msra.mxu0 %v17
  %97 = vmatpush.msra.mxu0 %v16
  %98 = vmatmul.f32.gmra.mxu0 %v79
  %v99 = vpop.f32.mrf.mxu0
  %v100 = vadd.f32 0.0, %v99
  %101 = vdwg.mxu0
  %v102 = vadd.f32 %v81, %v100
  %v103 = vtanh.pop %v102
  %s104 = scalar_lea.vmem %s0, 24
  %v105 = vld [vmem:[%s104] sm:$0xff]
  %106 = vmatpush.msra.mxu0 %v31
  %107 = vmatpush.msra.mxu0 %v30
  %108 = vmatpush.msra.mxu0 %v29
  %109 = vmatpush.msra.mxu0 %v28
  %110 = vmatpush.msra.mxu0 %v27
  %111 = vmatpush.msra.mxu0 %v26
  %112 = vmatpush.msra.mxu0 %v25
  %113 = vmatpush.msra.mxu0 %v24
  %114 = vmatpush.msra.mxu0 %v23
  %115 = vmatpush.msra.mxu0 %v22
  %116 = vmatpush.msra.mxu0 %v21
  %117 = vmatpush.msra.mxu0 %v20
  %118 = vmatpush.msra.mxu0 %v19
  %119 = vmatpush.msra.mxu0 %v18
  %120 = vmatpush.msra.mxu0 %v17
  %121 = vmatpush.msra.mxu0 %v16
  %122 = vmatmul.f32.gmra.mxu0 %v103
  %v123 = vpop.f32.mrf.mxu0
  %v124 = vadd.f32 0.0, %v123
  %125 = vdwg.mxu0
  %v126 = vadd.f32 %v105, %v124
  %v127 = vtanh.pop %v126
  %s128 = scalar_lea.vmem %s0, 32
  %v129 = vld [vmem:[%s128] sm:$0xff]
  %130 = vmatpush.msra.mxu0 %v31
  %131 = vmatpush.msra.mxu0 %v30
  %132 = vmatpush.msra.mxu0 %v29
  %133 = vmatpush.msra.mxu0 %v28
  %134 = vmatpush.msra.mxu0 %v27
  %135 = vmatpush.msra.mxu0 %v26
  %136 = vmatpush.msra.mxu0 %v25
  %137 = vmatpush.msra.mxu0 %v24
  %138 = vmatpush.msra.mxu0 %v23
  %139 = vmatpush.msra.mxu0 %v22
  %140 = vmatpush.msra.mxu0 %v21
  %141 = vmatpush.msra.mxu0 %v20
  %142 = vmatpush.msra.mxu0 %v19
  %143 = vmatpush.msra.mxu0 %v18
  %144 = vmatpush.msra.mxu0 %v17
  %145 = vmatpush.msra.mxu0 %v16
  %146 = vmatmul.f32.gmra.mxu0 %v127
  %v147 = vpop.f32.mrf.mxu0
  %v148 = vadd.f32 0.0, %v147
  %149 = vdwg.mxu0
  %v150 = vadd.f32 %v129, %v148
  %v151 = vtanh.pop %v150
  %s152 = scalar_lea.vmem %s0, 40
  %v153 = vld [vmem:[%s152] sm:$0xff]
  %154 = vmatpush.msra.mxu0 %v31
  %155 = vmatpush.msra.mxu0 %v30
  %156 = vmatpush.msra.mxu0 %v29
  %157 = vmatpush.msra.mxu0 %v28
  %158 = vmatpush.msra.mxu0 %v27
  %159 = vmatpush.msra.mxu0 %v26
  %160 = vmatpush.msra.mxu0 %v25
  %161 = vmatpush.msra.mxu0 %v24
  %162 = vmatpush.msra.mxu0 %v23
  %163 = vmatpush.msra.mxu0 %v22
  %164 = vmatpush.msra.mxu0 %v21
  %165 = vmatpush.msra.mxu0 %v20
  %166 = vmatpush.msra.mxu0 %v19
  %167 = vmatpush.msra.mxu0 %v18
  %168 = vmatpush.msra.mxu0 %v17
  %169 = vmatpush.msra.mxu0 %v16
  %170 = vmatmul.f32.gmra.mxu0 %v151
  %v171 = vpop.f32.mrf.mxu0
  %v172 = vadd.f32 0.0, %v171
  %173 = vdwg.mxu0
  %v174 = vadd.f32 %v153, %v172
  %v175 = vtanh.pop %v174
  %s176 = scalar_lea.vmem %s0, 48
  %v177 = vld [vmem:[%s176] sm:$0xff]
  %178 = vmatpush.msra.mxu0 %v31
  %179 = vmatpush.msra.mxu0 %v30
  %180 = vmatpush.msra.mxu0 %v29
  %181 = vmatpush.msra.mxu0 %v28
  %182 = vmatpush.msra.mxu0 %v27
  %183 = vmatpush.msra.mxu0 %v26
  %184 = vmatpush.msra.mxu0 %v25
  %185 = vmatpush.msra.mxu0 %v24
  %186 = vmatpush.msra.mxu0 %v23
  %187 = vmatpush.msra.mxu0 %v22
  %188 = vmatpush.msra.mxu0 %v21
  %189 = vmatpush.msra.mxu0 %v20
  %190 = vmatpush.msra.mxu0 %v19
  %191 = vmatpush.msra.mxu0 %v18
  %192 = vmatpush.msra.mxu0 %v17
  %193 = vmatpush.msra.mxu0 %v16
  %194 = vmatmul.f32.gmra.mxu0 %v175
  %v195 = vpop.f32.mrf.mxu0
  %v196 = vadd.f32 0.0, %v195
  %197 = vdwg.mxu0
  %v198 = vadd.f32 %v177, %v196
  %v199 = vtanh.pop %v198
  %s200 = scalar_lea.vmem %s0, 56
  %v201 = vld [vmem:[%s200] sm:$0xff]
  %202 = vmatpush.msra.mxu0 %v31
  %203 = vmatpush.msra.mxu0 %v30
  %204 = vmatpush.msra.mxu0 %v29
  %205 = vmatpush.msra.mxu0 %v28
  %206 = vmatpush.msra.mxu0 %v27
  %207 = vmatpush.msra.mxu0 %v26
  %208 = vmatpush.msra.mxu0 %v25
  %209 = vmatpush.msra.mxu0 %v24
  %210 = vmatpush.msra.mxu0 %v23
  %211 = vmatpush.msra.mxu0 %v22
  %212 = vmatpush.msra.mxu0 %v21
  %213 = vmatpush.msra.mxu0 %v20
  %214 = vmatpush.msra.mxu0 %v19
  %215 = vmatpush.msra.mxu0 %v18
  %216 = vmatpush.msra.mxu0 %v17
  %217 = vmatpush.msra.mxu0 %v16
  %218 = vmatmul.f32.gmra.mxu0 %v199
  %v219 = vpop.f32.mrf.mxu0
  %v220 = vadd.f32 0.0, %v219
  %221 = vdwg.mxu0
  %v222 = vadd.f32 %v201, %v220
  %v223 = vtanh.pop %v222
  %224 = vst [vmem:[#allocation2] sm:$0xff] %v223
  // Predicated region
  $region14: #{rnn_forward.1} parent=0 // pred_check
    %p225 = pneg %p11
  $region15: #{rnn_forward.1} parent=0 // pred_check_branch
    %227 = sbr.rel (%p225) target = $region17
  $region16: #{rnn_forward.1} parent=0 // pred_region
    %v228 = vld [vmem:[#allocation2] sm:$0xff]
    %229 = vst [vmem:[%s2] sm:$0xff] %v228
  $region17: #{rnn_forward.1} parent=0 // pred_fallthru
    _
  // Predicated region
  $region18: #{rnn_forward.1} parent=0 // pred_check
    _
  $region19: #{rnn_forward.1} parent=0 // pred_check_branch
    %231 = sbr.rel (0) target = $region21
  $region20: #{rnn_forward.1} parent=0 // pred_region
    _
  $region21: #{rnn_forward.1} parent=0 // pred_fallthru
    _
  // Predicated region
  $region22: #{rnn_forward.1} parent=0 // pred_check
    _
  $region23: #{rnn_forward.1} parent=0 // pred_check_branch
    %233 = sbr.rel (0) target = $region25
  $region24: #{rnn_forward.1} parent=0 // pred_region
    _
  $region25: #{rnn_forward.1} parent=0 // pred_fallthru
    _

</llo_original>
